<compile_context>
chip_gen: v7x
topology: tpu7x:2x2x1
jax: 0.10.0
libtpu: 0.0.40
codegen_flags: <defaults>
</compile_context>

<pallas_src>
import jax
import jax.numpy as jnp
from jax.experimental import pallas as pl
from jax.experimental.pallas import tpu as pltpu


def _logreg_kernel(w_ref, b_ref, x_ref, o_ref):
    # w_ref, b_ref: (1, 1) f32 scalars in SMEM; x_ref / o_ref: (tile_rows, lanes) VMEM tiles.
    w = w_ref[0, 0]
    b = b_ref[0, 0]
    z = x_ref[...].astype(jnp.float32) * w + b            # affine, elementwise on the VPU
    # Exact, numerically stable sigmoid via a single EUP transcendental:
    # sigmoid(z) = 0.5 * tanh(0.5 * z) + 0.5
    o_ref[...] = (0.5 * jnp.tanh(0.5 * z) + 0.5).astype(o_ref.dtype)


def logistic_regression(x, w, b, *, lanes=512, max_tile_rows=2048,
                        small_input_threshold=65536, force_pallas=False):
    """y = sigmoid(x * w + b) elementwise (nn.Linear(1, 1) + sigmoid). Output shape == input shape."""
    orig_shape = x.shape
    orig_dtype = x.dtype
    total = int(x.size)

    w_s = jnp.asarray(w, jnp.float32).reshape(())
    b_s = jnp.asarray(b, jnp.float32).reshape(())

    # --- small-input fast path --------------------------------------------
    # For the module's nominal (batch, 1) inputs, pallas_call launch/grid overhead dwarfs
    # the handful of flops; XLA fuses this trivially.
    if total < small_input_threshold and not force_pallas:
        z = x.astype(jnp.float32) * w_s + b_s
        return jax.nn.sigmoid(z).astype(orig_dtype).reshape(orig_shape)

    # --- lane-dense slab layout -------------------------------------------
    itemsize = jnp.dtype(orig_dtype).itemsize
    sublane = max(8, 32 // max(itemsize, 1))        # 8 for f32, 16 for bf16, 32 for int8/fp8
    lanes = max(128, (lanes // 128) * 128)          # lane-dense: lanes % 128 == 0

    flat = x.reshape(-1)
    rows = pl.cdiv(total, lanes)
    rows = pl.cdiv(rows, sublane) * sublane         # sublane alignment for this dtype

    # Tile sizing: up to ~4 MiB per f32 tile (tile_rows=2048 @ lanes=512); double-buffered
    # in + out ~= 16 MiB, covered by vmem_limit_bytes below on every generation.
    max_tile_rows = max(sublane, (max_tile_rows // sublane) * sublane)
    min_tile_rows = min(rows, max(sublane, (512 * 1024) // (lanes * itemsize)))  # >= ~512 KiB/tile
    tile_rows = min(max_tile_rows, rows)
    tile_rows = max(tile_rows, min_tile_rows)
    tile_rows = pl.cdiv(tile_rows, sublane) * sublane

    padded_rows = pl.cdiv(rows, tile_rows) * tile_rows
    padded_total = padded_rows * lanes

    if padded_total == total:
        # Fast path: pure reshape, no extra HBM traffic beyond the kernel itself.
        slab = flat.reshape(padded_rows, lanes)
        needs_slice = False
    else:
        # Ragged-tail fallback: pad + final slice cost one extra HBM round trip.
        # TODO(synk): mask the tail store in-kernel (scalar-prefetch `total`) to avoid the
        # pad/slice round trip for large unaligned inputs.
        flat = jnp.pad(flat, (0, padded_total - total))
        slab = flat.reshape(padded_rows, lanes)
        needs_slice = True

    num_tiles = padded_rows // tile_rows
    w2 = w_s.reshape(1, 1)
    b2 = b_s.reshape(1, 1)

    out_slab = pl.pallas_call(
        _logreg_kernel,
        out_shape=jax.ShapeDtypeStruct((padded_rows, lanes), orig_dtype),
        grid_spec=pltpu.PrefetchScalarGridSpec(
            num_scalar_prefetch=0,
            grid=(num_tiles,),
            in_specs=[
                pl.BlockSpec((1, 1), lambda i: (0, 0), memory_space=pltpu.SMEM),  # w
                pl.BlockSpec((1, 1), lambda i: (0, 0), memory_space=pltpu.SMEM),  # b
                pl.BlockSpec((tile_rows, lanes), lambda i: (i, 0)),               # x tile
            ],
            out_specs=pl.BlockSpec((tile_rows, lanes), lambda i: (i, 0)),
        ),
        compiler_params=pltpu.CompilerParams(
            dimension_semantics=("parallel",),        # shard row tiles across TCs on v7x
            vmem_limit_bytes=32 * 1024 * 1024,        # 4 MiB tiles double-buffered, incl. v5e
        ),
    )(w2, b2, slab)

    if needs_slice:
        return out_slab.reshape(-1)[:total].reshape(orig_shape)
    return out_slab.reshape(orig_shape)


if __name__ == "__main__":
    key = jax.random.PRNGKey(0)
    kx, kw, kb = jax.random.split(key, 3)

    # Deterministic parameter init (mimics torch.nn.Linear(1,1): U(-1, 1) since fan_in=1).
    w = jax.random.uniform(kw, (1, 1), jnp.float32, minval=-1.0, maxval=1.0)
    b = jax.random.uniform(kb, (1,), jnp.float32, minval=-1.0, maxval=1.0)

    # Nominal module-sized input (batch, 1): takes the small-input JAX fast path.
    x_small = jax.random.normal(kx, (8, 1), jnp.float32)
    out_small = jax.block_until_ready(logistic_regression(x_small, w, b))
    ref_small = jax.nn.sigmoid(x_small @ w.T + b)
    assert out_small.shape == (8, 1)
    assert jnp.allclose(out_small, ref_small, atol=1e-5), "small-input path mismatch"

    # Same small input forced through the Pallas kernel (exercises the pad fallback path).
    out_small_pk = jax.block_until_ready(logistic_regression(x_small, w, b, force_pallas=True))
    assert out_small_pk.shape == (8, 1)
    assert jnp.allclose(out_small_pk, ref_small, atol=1e-5), "pallas pad-path mismatch"

    # Larger batch: lane-dense, pad-free, multi-tile Pallas path (2 tiles of (256, 512)).
    x_big = jax.random.normal(kx, (262144, 1), jnp.float32)
    out_big = jax.block_until_ready(
        logistic_regression(x_big, w, b, max_tile_rows=64, force_pallas=True))
    ref_big = jax.nn.sigmoid(x_big @ w.T + b)
    assert out_big.shape == (262144, 1)
    assert jnp.allclose(out_big, ref_big, atol=1e-5), "multi-tile path mismatch"

    print("KERNEL_OK")
</pallas_src>

<mosaic_0001>
module attributes {stable_mosaic.version = 11 : i64} {
  func.func @_logreg_kernel(%arg0: i32, %arg1: memref<1x1xf32, #tpu.memory_space<smem>>, %arg2: memref<1x1xf32, #tpu.memory_space<smem>>, %arg3: memref<8x512xf32, #tpu.memory_space<vmem>>, %arg4: memref<8x512xf32, #tpu.memory_space<vmem>>) attributes {dimension_semantics = [#tpu.dimension_semantics<parallel>], iteration_bounds = array<i64: 1>, scalar_prefetch = 0 : i64, scratch_operands = 0 : i64, tpu.core_type = #tpu.core_type<tc>, window_params = [{transform_indices = @transform_0, window_bounds = array<i64: 1, 1>}, {transform_indices = @transform_1, window_bounds = array<i64: 1, 1>}, {transform_indices = @transform_2, window_bounds = array<i64: 8, 512>}, {transform_indices = @transform_3, window_bounds = array<i64: 8, 512>}]} {
    %c0 = arith.constant 0 : index
    %c0_0 = arith.constant 0 : index
    %0 = memref.load %arg1[%c0, %c0_0] : memref<1x1xf32, #tpu.memory_space<smem>>
    %c0_1 = arith.constant 0 : index
    %c0_2 = arith.constant 0 : index
    %1 = memref.load %arg2[%c0_1, %c0_2] : memref<1x1xf32, #tpu.memory_space<smem>>
    %c0_3 = arith.constant 0 : index
    %c0_4 = arith.constant 0 : index
    %2 = vector.load %arg3[%c0_3, %c0_4] : memref<8x512xf32, #tpu.memory_space<vmem>>, vector<8x512xf32>
    %3 = vector.broadcast %0 : f32 to vector<8x512xf32>
    %4 = arith.mulf %2, %3 : vector<8x512xf32>
    %5 = vector.broadcast %1 : f32 to vector<8x512xf32>
    %6 = arith.addf %4, %5 : vector<8x512xf32>
    %cst = arith.constant 5.000000e-01 : f32
    %7 = vector.broadcast %cst : f32 to vector<8x512xf32>
    %8 = arith.mulf %7, %6 : vector<8x512xf32>
    %9 = math.tanh %8 : vector<8x512xf32>
    %cst_5 = arith.constant 5.000000e-01 : f32
    %10 = vector.broadcast %cst_5 : f32 to vector<8x512xf32>
    %11 = arith.mulf %10, %9 : vector<8x512xf32>
    %cst_6 = arith.constant 5.000000e-01 : f32
    %12 = vector.broadcast %cst_6 : f32 to vector<8x512xf32>
    %13 = arith.addf %11, %12 : vector<8x512xf32>
    %c0_7 = arith.constant 0 : index
    %c0_8 = arith.constant 0 : index
    %14 = vector.load %arg4[%c0_7, %c0_8] : memref<8x512xf32, #tpu.memory_space<vmem>>, vector<8x512xf32>
    tpu.vector_store %arg4[%c0_7, %c0_8], %13 {strides = array<i32>} : memref<8x512xf32, #tpu.memory_space<vmem>>, vector<8x512xf32>,
    return
  }
  func.func @transform_0(%arg0: i32) -> (i32, i32) {
    %c0_i32 = arith.constant 0 : i32
    %c0_i32_0 = arith.constant 0 : i32
    %c0_i32_1 = arith.constant 0 : i32
    return %c0_i32, %c0_i32_0 : i32, i32
  }
  func.func @transform_1(%arg0: i32) -> (i32, i32) {
    %c0_i32 = arith.constant 0 : i32
    %c0_i32_0 = arith.constant 0 : i32
    %c0_i32_1 = arith.constant 0 : i32
    return %c0_i32, %c0_i32_0 : i32, i32
  }
  func.func @transform_2(%arg0: i32) -> (i32, i32) {
    %c0_i32 = arith.constant 0 : i32
    %c0_i32_0 = arith.constant 0 : i32
    return %arg0, %c0_i32 : i32, i32
  }
  func.func @transform_3(%arg0: i32) -> (i32, i32) {
    %c0_i32 = arith.constant 0 : i32
    %c0_i32_0 = arith.constant 0 : i32
    return %arg0, %c0_i32 : i32, i32
  }
}

</mosaic_0001>

<llo_original>
// kernel: tpu_custom_call.1
$region0: #{tpu_custom_call.1}
  #allocation0 [shape = 'u32[]', space=smem, size = 0x4, offset = 0x4, fixed_abs, tag = 'smem constant byte address 0x4 - core index']
  #allocation1 [shape = 'u32[144,128]{1,0:T(1,128)}', space=vmem, size = 0x12000, scoped, tag = 'internal scratch']
  #allocation2 [shape = 'f32[1,1]{1,0:T(1,128)S(6)}', space=smem, size = 0x200, scoped, tag = 'scoped memory for tpu_custom_call.1']
  #allocation3 [shape = 'f32[1,1]{1,0:T(1,128)S(6)}', space=smem, size = 0x200, scoped, tag = 'scoped memory for tpu_custom_call.1']
  %s0 = inlined_call_operand.<no memory space> [shape: f32[1,1], index: 0, kind: input, shape index: {}]
  %s1 = inlined_call_operand.<no memory space> [shape: f32[1,1], index: 1, kind: input, shape index: {}]
  %s2 = inlined_call_operand.hbm [shape: f32[8,512], index: 2, kind: input, shape index: {}]
  %s3 = inlined_call_operand.hbm [shape: f32[8,512], index: 3, kind: output, shape index: {}]
  %s4 = sld [smem:[#allocation0]]
  $region26: #{tpu_custom_call.1} parent=0
    _
  %s6 = ssub.s32 1, %s4
  %s7 = scalar_select 0, %s6, %s4
  %8 = sst [smem:[#allocation2]] %s0
  %9 = sst [smem:[#allocation3]] %s1
  $region1: #{tpu_custom_call.1} parent=0
    #allocation4 [shape = 'u8[16384]{0}', space=vmem, size = 0x4000, scoped, tag = 'input window, operand 2, single buffered']
    #allocation5 [shape = 's32[1]{0}', space=sflag, size = 0x4, scoped, tag = 'scoped memory for tpu_custom_call.1']
    #allocation6 [shape = 's32[1]{0}', space=sflag, size = 0x4, scoped, tag = 'scoped memory for tpu_custom_call.1']
    #allocation7 [shape = 'u8[16384]{0}', space=vmem, size = 0x4000, scoped, tag = 'output window, operand 0, single buffered']
    %10 = vsyncpa [#allocation5], 0
    %11 = vsyncpa [#allocation6], 0
    // Predicated region
    $region2: #{tpu_custom_call.1} parent=1 // pred_check
      _
    $region3: #{tpu_custom_call.1} parent=1 // pred_check_branch
      %13 = sbr.rel (0) target = $region5
    $region4: #{tpu_custom_call.1} parent=1 // pred_region
      _
    $region5: #{tpu_custom_call.1} parent=1 // pred_fallthru
      _
    // Predicated region
    $region6: #{tpu_custom_call.1} parent=1 // pred_check
      _
    $region7: #{tpu_custom_call.1} parent=1 // pred_check_branch
      %15 = sbr.rel (0) target = $region9
    $region8: #{tpu_custom_call.1} parent=1 // pred_region
      _
    $region9: #{tpu_custom_call.1} parent=1 // pred_fallthru
      _
    // Predicated region
    $region10: #{tpu_custom_call.1} parent=1 // pred_check
      _
    $region11: #{tpu_custom_call.1} parent=1 // pred_check_branch
      %17 = sbr.rel (0) target = $region13
    $region12: #{tpu_custom_call.1} parent=1 // pred_region
      %s19 = ssub.s32 512, 512
      %20 = vsyncadd [#allocation5], %s19
      %s22 = sshll.u32 [#allocation4], 4
      %s23 = int_to_ptr.vmem [resolvable:$true] %s22
      %25 = dma.hbm_to_vmem [thread:$0]  %s2, 512, %s23, [#allocation5]
    $region13: #{tpu_custom_call.1} parent=1 // pred_fallthru
      _
    // Predicated region
    $region14: #{tpu_custom_call.1} parent=1 // pred_check
      _
    $region15: #{tpu_custom_call.1} parent=1 // pred_check_branch
      %27 = sbr.rel (0) target = $region17
    $region16: #{tpu_custom_call.1} parent=1 // pred_region
      %28 = dma.done [#allocation5], 512
    $region17: #{tpu_custom_call.1} parent=1 // pred_fallthru
      _
    %s29 = sld [smem:[#allocation2]]
    %s30 = sld [smem:[#allocation3]]
    %v31 = vld [vmem:[#allocation4] sm:$0xff]
    %v32 = vld [vmem:[#allocation4 + $0x8] sm:$0xff]
    %v33 = vld [vmem:[#allocation4 + $0x10] sm:$0xff]
    %v34 = vld [vmem:[#allocation4 + $0x18] sm:$0xff]
    %v35 = vstv %s29
    %v36 = vmul.f32 %v31, %v35
    %v37 = vmul.f32 %v32, %v35
    %v38 = vmul.f32 %v33, %v35
    %v39 = vmul.f32 %v34, %v35
    %v40 = vstv %s30
    %v41 = vadd.f32 %v36, %v40
    %v42 = vadd.f32 %v37, %v40
    %v43 = vadd.f32 %v38, %v40
    %v44 = vadd.f32 %v39, %v40
    %v45 = vmul.f32 %v41, 0.5
    %v46 = vmul.f32 %v42, 0.5
    %v47 = vmul.f32 %v43, 0.5
    %v48 = vmul.f32 %v44, 0.5
    %v49 = vtanh.pop %v45
    %v50 = vtanh.pop %v46
    %v51 = vtanh.pop %v47
    %v52 = vtanh.pop %v48
    %v53 = vmul.f32 %v49, 0.5
    %v54 = vmul.f32 %v50, 0.5
    %v55 = vmul.f32 %v51, 0.5
    %v56 = vmul.f32 %v52, 0.5
    %v57 = vadd.f32 %v53, 0.5
    %v58 = vadd.f32 %v54, 0.5
    %v59 = vadd.f32 %v55, 0.5
    %v60 = vadd.f32 %v56, 0.5
    %61 = vst [vmem:[#allocation7] sm:$0xff] %v57
    %62 = vst [vmem:[#allocation7 + $0x8] sm:$0xff] %v58
    %63 = vst [vmem:[#allocation7 + $0x10] sm:$0xff] %v59
    %64 = vst [vmem:[#allocation7 + $0x18] sm:$0xff] %v60
    // Predicated region
    $region18: #{tpu_custom_call.1} parent=1 // pred_check
      _
    $region19: #{tpu_custom_call.1} parent=1 // pred_check_branch
      %66 = sbr.rel (0) target = $region21
    $region20: #{tpu_custom_call.1} parent=1 // pred_region
      %s68 = ssub.s32 512, 512
      %69 = vsyncadd [#allocation6], %s68
      %s71 = sshll.u32 [#allocation7], 4
      %s72 = int_to_ptr.vmem [resolvable:$true] %s71
      %74 = dma.vmem_to_hbm [thread:$0]  %s72, 512, %s3, [#allocation6]
    $region21: #{tpu_custom_call.1} parent=1 // pred_fallthru
      _
    // Predicated region
    $region22: #{tpu_custom_call.1} parent=1 // pred_check
      _
    $region23: #{tpu_custom_call.1} parent=1 // pred_check_branch
      %76 = sbr.rel (0) target = $region25
    $region24: #{tpu_custom_call.1} parent=1 // pred_region
      %77 = dma.done [#allocation6], 512
    $region25: #{tpu_custom_call.1} parent=1 // pred_fallthru
      _
    %78 = vsyncpa [#allocation5], 1
    %79 = vsyncpa [#allocation6], 1

</llo_original>
